<compile_context>
chip_gen: v5e
topology: v5e:2x2
jax: 0.10.0
libtpu: 0.0.40
codegen_flags: <defaults>
</compile_context>

<pallas_src>
import functools

import jax
import jax.numpy as jnp
from jax.experimental import pallas as pl
from jax.experimental.pallas import tpu as pltpu


def _round_up(x: int, mult: int) -> int:
    return ((x + mult - 1) // mult) * mult


def _field_component_kernel(x_ref, w_ref, b_ref, o_ref):
    # x_ref: (TM, in_dim)   w_ref: (in_dim, TN)   b_ref: (1, TN)
    # o_ref: (TM, TN)
    acc = jnp.dot(x_ref[...], w_ref[...], preferred_element_type=jnp.float32)
    o_ref[...] = (acc + b_ref[...]).astype(o_ref.dtype)


def _choose_tiles(m: int, in_dim: int, out_dim_p: int, itemsize: int):
    """Pick (TM, TN) so the double-buffered VMEM footprint stays small."""
    tn = min(out_dim_p, 512)                      # multiple of 128 by construction
    tm = min(512, _round_up(max(m, 1), 8))        # multiple of 8

    def footprint(tm_, tn_):
        # 2x for double-buffered pipelining of every BlockSpec.
        return 2 * itemsize * (tm_ * in_dim + in_dim * tn_ + tn_ + tm_ * tn_)

    budget = 24 * 1024 * 1024
    while tm > 8 and footprint(tm, tn) > budget:
        tm = max(8, tm // 2)
    tm = max(8, (tm // 8) * 8)
    return tm, tn


@functools.partial(jax.jit, static_argnames=())
def field_component_forward(x, w, b):
    """Apply the FieldComponent projection: [*bs, in_dim] -> [*bs, out_dim]."""
    *bs, in_dim = x.shape
    out_dim = w.shape[1]

    m = 1
    for d in bs:
        m *= d
    x2d = x.reshape(m, in_dim)

    itemsize = jnp.dtype(x.dtype).itemsize

    # ---- Lane-dense output: pad out_dim up to a multiple of 128, then to TN.
    out_dim_p = max(128, _round_up(out_dim, 128))
    tm, tn = _choose_tiles(m, in_dim, out_dim_p, itemsize)
    out_dim_p = _round_up(out_dim_p, tn)
    if out_dim_p != out_dim:
        # Zero-padded columns contribute nothing; sliced off after the kernel.
        w_p = jnp.pad(w, ((0, 0), (0, out_dim_p - out_dim)))
        b_p = jnp.pad(b, (0, out_dim_p - out_dim))
    else:
        w_p, b_p = w, b
    b2d = b_p.reshape(1, out_dim_p)

    # ---- Tile / pad the M axis. --------------------------------------------
    m_pad = _round_up(max(m, 1), tm)
    if m_pad != m:
        x2d = jnp.pad(x2d, ((0, m_pad - m), (0, 0)))

    grid = (m_pad // tm, out_dim_p // tn)

    out2d = pl.pallas_call(
        _field_component_kernel,
        out_shape=jax.ShapeDtypeStruct((m_pad, out_dim_p), x.dtype),
        grid_spec=pltpu.PrefetchScalarGridSpec(
            num_scalar_prefetch=0,
            grid=grid,
            in_specs=[
                # x: one M-tile per i; constant across the inner j axis, so it
                # stays VMEM-resident while we sweep the N tiles.
                pl.BlockSpec((tm, in_dim), lambda i, j: (i, 0)),
                # W / b: one lane-dense N-tile per j; constant across i.
                pl.BlockSpec((in_dim, tn), lambda i, j: (0, j)),
                pl.BlockSpec((1, tn), lambda i, j: (0, j)),
            ],
            out_specs=pl.BlockSpec((tm, tn), lambda i, j: (i, j)),
        ),
        compiler_params=pltpu.CompilerParams(
            # All tiles are independent -> shard across TensorCores if present.
            dimension_semantics=("parallel", "parallel"),
        ),
        cost_estimate=pl.CostEstimate(
            flops=2 * m_pad * in_dim * out_dim_p,
            bytes_accessed=(
                m_pad * in_dim              # read x
                + in_dim * out_dim_p        # read W
                + out_dim_p                 # read b
                + m_pad * out_dim_p         # write out
            ) * itemsize,
            transcendentals=0,
        ),
    )(x2d, w_p, b2d)

    # Strip M / out_dim padding and restore the leading batch shape.
    out2d = out2d[:m, :out_dim]
    return out2d.reshape(*bs, out_dim)


if __name__ == "__main__":
    key = jax.random.PRNGKey(0)
    k_x, k_w, k_b = jax.random.split(key, 3)

    # Small shapes consistent with the module's contract: *bs = (2, 8).
    in_dim = 32
    out_dim = 64
    bs = (2, 8)

    x = jax.random.normal(k_x, (*bs, in_dim), dtype=jnp.float32)
    # Deterministic synthetic parameters for the in_dim -> out_dim map.
    w = jax.random.normal(k_w, (in_dim, out_dim), dtype=jnp.float32) * 0.05
    b = jax.random.normal(k_b, (out_dim,), dtype=jnp.float32) * 0.01

    out = field_component_forward(x, w, b)
    jax.block_until_ready(out)

    # Cross-check against plain-JAX reference to validate kernel semantics.
    ref = (x.reshape(-1, in_dim) @ w + b[None, :]).reshape(*bs, out_dim)
    assert out.shape == (*bs, out_dim)
    assert jnp.allclose(out, ref, atol=1e-5, rtol=1e-5)

    print("KERNEL_OK")
</pallas_src>

<mosaic_0001>
module attributes {stable_mosaic.version = 11 : i64} {
  func.func @_field_component_kernel(%arg0: i32, %arg1: i32, %arg2: memref<16x32xf32, #tpu.memory_space<vmem>>, %arg3: memref<32x128xf32, #tpu.memory_space<vmem>>, %arg4: memref<1x128xf32, #tpu.memory_space<vmem>>, %arg5: memref<16x128xf32, #tpu.memory_space<vmem>>) attributes {dimension_semantics = [#tpu.dimension_semantics<parallel>, #tpu.dimension_semantics<parallel>], iteration_bounds = array<i64: 1, 1>, scalar_prefetch = 0 : i64, scratch_operands = 0 : i64, tpu.core_type = #tpu.core_type<tc>, window_params = [{transform_indices = @transform_0, window_bounds = array<i64: 16, 32>}, {transform_indices = @transform_1, window_bounds = array<i64: 32, 128>}, {transform_indices = @transform_2, window_bounds = array<i64: 1, 128>}, {transform_indices = @transform_3, window_bounds = array<i64: 16, 128>}]} {
    %c0 = arith.constant 0 : index
    %c0_0 = arith.constant 0 : index
    %0 = vector.load %arg2[%c0, %c0_0] : memref<16x32xf32, #tpu.memory_space<vmem>>, vector<16x32xf32>
    %c0_1 = arith.constant 0 : index
    %c0_2 = arith.constant 0 : index
    %1 = vector.load %arg3[%c0_1, %c0_2] : memref<32x128xf32, #tpu.memory_space<vmem>>, vector<32x128xf32>
    %cst = arith.constant dense<0.000000e+00> : vector<16x128xf32>
    %2 = tpu.matmul %0, %1, %cst {dimension_numbers = #tpu.dot_dimension_numbers<[1], [0], [0], [1], [0, 0, 1, 1], [], []>} : vector<16x32xf32>, vector<32x128xf32>, vector<16x128xf32> -> vector<16x128xf32>
    %c0_3 = arith.constant 0 : index
    %c0_4 = arith.constant 0 : index
    %3 = vector.load %arg4[%c0_3, %c0_4] : memref<1x128xf32, #tpu.memory_space<vmem>>, vector<1x128xf32>
    %4 = vector.broadcast %3 : vector<1x128xf32> to vector<16x128xf32>
    %5 = arith.addf %2, %4 : vector<16x128xf32>
    %c0_5 = arith.constant 0 : index
    %c0_6 = arith.constant 0 : index
    %6 = vector.load %arg5[%c0_5, %c0_6] : memref<16x128xf32, #tpu.memory_space<vmem>>, vector<16x128xf32>
    tpu.vector_store %arg5[%c0_5, %c0_6], %5 {strides = array<i32>} : memref<16x128xf32, #tpu.memory_space<vmem>>, vector<16x128xf32>,
    return
  }
  func.func @transform_0(%arg0: i32, %arg1: i32) -> (i32, i32) {
    %c0_i32 = arith.constant 0 : i32
    %c0_i32_0 = arith.constant 0 : i32
    return %arg0, %c0_i32 : i32, i32
  }
  func.func @transform_1(%arg0: i32, %arg1: i32) -> (i32, i32) {
    %c0_i32 = arith.constant 0 : i32
    %c0_i32_0 = arith.constant 0 : i32
    return %c0_i32, %arg1 : i32, i32
  }
  func.func @transform_2(%arg0: i32, %arg1: i32) -> (i32, i32) {
    %c0_i32 = arith.constant 0 : i32
    %c0_i32_0 = arith.constant 0 : i32
    return %c0_i32, %arg1 : i32, i32
  }
  func.func @transform_3(%arg0: i32, %arg1: i32) -> (i32, i32) {
    %c0_i32 = arith.constant 0 : i32
    return %arg0, %arg1 : i32, i32
  }
}

</mosaic_0001>

<llo_original>
// kernel: field_component_forward.1
$region0: #{field_component_forward.1}
  #allocation0 [shape = 'u32[]', space=smem, size = 0x4, offset = 0x4, fixed_abs, tag = 'smem constant byte address 0x4 - core index']
  #allocation1 [shape = 'u32[72,128]{1,0:T(1,128)}', space=vmem, size = 0x9000, scoped, tag = 'internal scratch']
  %s0 = inlined_call_operand.vmem [shape: f32[16,32], index: 0, kind: input, shape index: {}]
  %s1 = inlined_call_operand.vmem [shape: f32[32,128], index: 1, kind: input, shape index: {}]
  %s2 = inlined_call_operand.vmem [shape: f32[1,128], index: 2, kind: input, shape index: {}]
  %s3 = inlined_call_operand.vmem [shape: f32[16,128], index: 3, kind: output, shape index: {}]
  %s4 = sld [smem:[#allocation0]]
  $region22: #{field_component_forward.1} parent=0
    _
  %s6 = ssub.s32 1, %s4
  %s7 = scalar_select 0, %s6, %s4
  // Predicated region
  $region2: #{field_component_forward.1} parent=0 // pred_check
    _
  $region3: #{field_component_forward.1} parent=0 // pred_check_branch
    %9 = sbr.rel (0) target = $region5
  $region4: #{field_component_forward.1} parent=0 // pred_region
    _
  $region5: #{field_component_forward.1} parent=0 // pred_fallthru
    _
  // Predicated region
  $region6: #{field_component_forward.1} parent=0 // pred_check
    _
  $region7: #{field_component_forward.1} parent=0 // pred_check_branch
    %11 = sbr.rel (0) target = $region9
  $region8: #{field_component_forward.1} parent=0 // pred_region
    _
  $region9: #{field_component_forward.1} parent=0 // pred_fallthru
    _
  // Predicated region
  $region10: #{field_component_forward.1} parent=0 // pred_check
    _
  $region11: #{field_component_forward.1} parent=0 // pred_check_branch
    %13 = sbr.rel (0) target = $region13
  $region12: #{field_component_forward.1} parent=0 // pred_region
    _
  $region13: #{field_component_forward.1} parent=0 // pred_fallthru
    _
  %v14 = vld [vmem:[%s0] sm:$0xff]
  %v15 = vld [vmem:[%s0 + $0x8] sm:$0xff]
  %v16 = vld [vmem:[%s1] sm:$0xff]
  %v17 = vld [vmem:[%s1 + $0x8] sm:$0xff]
  %v18 = vld [vmem:[%s1 + $0x10] sm:$0xff]
  %v19 = vld [vmem:[%s1 + $0x18] sm:$0xff]
  %v20 = vld [vmem:[%s2] sm:$0x1]
  %v22 = vperm.slane %v20, 0
  %vm24 = vcmask 261120
  %v26 = vsel %vm24, %v14, 0
  %v29 = vsel %vm24, %v15, 0
  %31 = vmatpush.msra.mxu0 0.0
  %32 = vmatpush.msra.mxu0 0.0
  %33 = vmatpush.msra.mxu0 0.0
  %34 = vmatpush.msra.mxu0 0.0
  %35 = vmatpush.msra.mxu0 0.0
  %36 = vmatpush.msra.mxu0 0.0
  %37 = vmatpush.msra.mxu0 0.0
  %38 = vmatpush.msra.mxu0 0.0
  %39 = vmatpush.msra.mxu0 0.0
  %40 = vmatpush.msra.mxu0 0.0
  %41 = vmatpush.msra.mxu0 0.0
  %42 = vmatpush.msra.mxu0 0.0
  %43 = vmatpush.msra.mxu0 %v19
  %44 = vmatpush.msra.mxu0 %v18
  %45 = vmatpush.msra.mxu0 %v17
  %46 = vmatpush.msra.mxu0 %v16
  %47 = vmatmul.f32.gmra.mxu0 %v26
  %v48 = vpop.f32.mrf.mxu0
  %v49 = vadd.f32 %v22, %v48
  %50 = vmatmul.f32.gmra.mxu0 %v29
  %v51 = vpop.f32.mrf.mxu0
  %v52 = vadd.f32 %v22, %v51
  %53 = vdwg.mxu0
  %54 = vst [vmem:[%s3] sm:$0xff] %v49
  %55 = vst [vmem:[%s3 + $0x8] sm:$0xff] %v52
  // Predicated region
  $region14: #{field_component_forward.1} parent=0 // pred_check
    _
  $region15: #{field_component_forward.1} parent=0 // pred_check_branch
    %57 = sbr.rel (0) target = $region17
  $region16: #{field_component_forward.1} parent=0 // pred_region
    _
  $region17: #{field_component_forward.1} parent=0 // pred_fallthru
    _
  // Predicated region
  $region18: #{field_component_forward.1} parent=0 // pred_check
    _
  $region19: #{field_component_forward.1} parent=0 // pred_check_branch
    %59 = sbr.rel (0) target = $region21
  $region20: #{field_component_forward.1} parent=0 // pred_region
    _
  $region21: #{field_component_forward.1} parent=0 // pred_fallthru
    _

</llo_original>
